<compile_context>
chip_gen: v7x
topology: tpu7x:2x2x1
jax: 0.10.0
libtpu: 0.0.40
codegen_flags: <defaults>
</compile_context>

<pallas_src>
import functools

import jax
import jax.numpy as jnp
import numpy as np
from jax import lax
from jax.experimental import pallas as pl
from jax.experimental.pallas import tpu as pltpu


# ----------------------------- Pallas kernel -----------------------------
def _mobileone_kernel(x_ref, w_ref, b_ref, o_ref, *, ksize):
    """One grid step processes `batch_block` images.

    x_ref : (Nb, Hp, WpCp)      bf16, zero-padded input; rows lane-dense, contraction
                                axis padded to a multiple of 128
    w_ref : (K, WpCp, W*Cout)   bf16 row-Toeplitz effective weight (branches folded)
    b_ref : (1, W*Cout)         f32 effective bias, tiled per output column
    o_ref : (Nb, H, W*Cout)     f32 lane-dense output (W*Cout = 128 here)
    """
    nb = x_ref.shape[0]
    wpc = x_ref.shape[2]
    h = o_ref.shape[1]
    wc = o_ref.shape[2]

    # One MXU matmul per kernel row; kw and cin merged into the padded contraction.
    # bf16 operands, f32 accumulation.
    acc = jnp.dot(x_ref[:, 0:h, :].reshape(nb * h, wpc),
                  w_ref[0], preferred_element_type=jnp.float32)
    for kh in range(1, ksize):
        # TODO(synk): kh = 1, 2 slice starts are not 8-sublane aligned (cheap at this
        # size).  When batch_block/H grow, switch to an (Hp, Nb, WpCp) layout so the
        # kh offset lands on the untiled leading axis.
        acc += jnp.dot(x_ref[:, kh:kh + h, :].reshape(nb * h, wpc),
                       w_ref[kh], preferred_element_type=jnp.float32)

    # Fused f32 bias + ReLU epilogue, single pass, then lane-dense store.
    out = jnp.maximum(acc + b_ref[...], 0.0)
    o_ref[...] = out.reshape(nb, h, wc).astype(o_ref.dtype)


# ----------------------------- host-side folds -----------------------------
def _fold_bn(w_oihw, bn, eps=1e-5):
    """Fuse eval-mode BatchNorm into the preceding conv (RepVGG-style)."""
    gamma, beta, mean, var = bn
    s = gamma / jnp.sqrt(var + eps)
    return w_oihw * s[:, None, None, None], beta - mean * s


def _reparam_kernel_bias(raw, cin, cout, ksize, eps=1e-5):
    """Mirror of MobileOneBlock._get_kernel_bias(): fold every branch into one
    effective (Cout, Cin, K, K) kernel + (Cout,) bias."""
    kernel = jnp.zeros((cout, cin, ksize, ksize), jnp.float32)
    bias = jnp.zeros((cout,), jnp.float32)

    # num_conv_branches x (KxK conv + BN)
    for b in range(raw["w3_oihw"].shape[0]):
        kb, bb = _fold_bn(raw["w3_oihw"][b], raw["bn_3"][b], eps)
        kernel += kb
        bias += bb

    ctr = ksize // 2
    # scale branch: 1x1 conv + BN, padded into the center tap
    k1, b1 = _fold_bn(raw["w1_oihw"], raw["bn_1"], eps)
    kernel = kernel.at[:, :, ctr, ctr].add(k1[:, :, 0, 0])
    bias += b1

    # identity branch (exists only when out_ch == in_ch and stride == 1)
    if cin == cout:
        g, be, m, v = raw["bn_id"]
        s = g / jnp.sqrt(v + eps)
        kernel = kernel.at[:, :, ctr, ctr].add(jnp.diag(s))
        bias += be - m * s

    return kernel, bias


def _build_row_toeplitz_weight(w_eff_oihw, width, pad, k_pad):
    """Build (K, k_pad, W*Cout) weight so that one matmul per kernel row kh performs
    the kw and cin contractions and emits a lane-dense W*Cout output.  Rows beyond
    Wp*Cin (up to k_pad) are zero -- they line up with the zero-padded input lanes."""
    cout, cin, K, _ = w_eff_oihw.shape
    w = jnp.transpose(w_eff_oihw, (2, 3, 1, 0))          # (K, K, Cin, Cout)
    w_big = jnp.zeros((K, k_pad, width * cout), w.dtype)
    for kw in range(K):
        for ow in range(width):
            w_big = w_big.at[:, (ow + kw) * cin:(ow + kw + 1) * cin,
                             ow * cout:(ow + 1) * cout].set(w[:, kw])
    return w_big


# ----------------------------- wrapper -----------------------------
def mobileone_block_forward(x_nchw, w_eff_oihw, b_eff, *, ksize=3, padding=1,
                            batch_block=None):
    """x_nchw: (N, Cin, H, W) float32.  Returns (N, Cout, H, W) float32."""
    N, Cin, H, W = x_nchw.shape
    Cout = w_eff_oihw.shape[0]
    pad = padding
    Hp, Wp = H + 2 * pad, W + 2 * pad
    WpC = Wp * Cin
    WpCp = ((WpC + 127) // 128) * 128   # pad the contraction axis to a lane multiple
    WC = W * Cout

    # One-time host-side folds (weights are constants under jit).  Matmul operands
    # go to bf16 (MXU fast path on v5e/v6e/v7x); accumulation stays f32 in-kernel.
    w_big = _build_row_toeplitz_weight(w_eff_oihw, W, pad, WpCp).astype(jnp.bfloat16)
    b_big = jnp.tile(b_eff, (W,)).reshape(1, WC).astype(jnp.float32)

    # Glue: NCHW -> NHWC, zero-pad spatially, flatten (Wp, Cin) -> Wp*Cin lane-dense
    # rows, zero-pad lanes to WpCp, cast to bf16.
    x_nhwc = jnp.transpose(x_nchw, (0, 2, 3, 1))
    x_pad = jnp.pad(x_nhwc, ((0, 0), (pad, pad), (pad, pad), (0, 0)))
    x_flat = x_pad.reshape(N, Hp, WpC)
    if WpCp != WpC:
        x_flat = jnp.pad(x_flat, ((0, 0), (0, 0), (0, WpCp - WpC)))
    x_flat = x_flat.astype(jnp.bfloat16)

    # Fixed VMEM costs: single-buffered weight + bias tile; per-image in/out blocks.
    w_bytes = ksize * WpCp * WC * 2
    b_bytes = 8 * ((WC + 127) // 128) * 128 * 4
    in_img = Hp * WpCp * 2                            # bf16 input block per image
    out_img = H * WC * x_nchw.dtype.itemsize          # f32 output block per image

    if batch_block is None:
        # Fill the MXU: pick the smallest divisor of N whose block gives at least 256
        # matmul rows (v6e/v7x MXU height) so per-step overhead is amortized, while
        # keeping as many parallel grid steps as possible.  Cap only by a VMEM block
        # budget (double-buffered in/out + single-buffered weight) safe on v5e.
        target_rows = 256
        budget = (12 << 20) - w_bytes - b_bytes
        cap = max(1, budget // (2 * (in_img + out_img)))
        divisors = [d for d in range(1, N + 1) if N % d == 0 and d <= cap]
        filled = [d for d in divisors if d * H >= target_rows]
        batch_block = min(filled) if filled else max(divisors)
    assert N % batch_block == 0
    # TODO(synk): when the batch grid collapses to a single step on v7x, tile H with a
    # ksize-1 halo to feed the second TensorCore instead of shrinking batch_block
    # below the MXU fill point.

    vmem_need = w_bytes + b_bytes + 2 * batch_block * (in_img + out_img)
    vmem_limit = int(min(max(2 * vmem_need, 4 << 20), 32 << 20))

    cost = pl.CostEstimate(
        flops=2 * N * H * ksize * WpCp * WC,
        transcendentals=0,
        bytes_accessed=(x_flat.size * 2 + w_big.size * 2 + b_big.size * 4
                        + N * H * WC * x_nchw.dtype.itemsize))

    kernel = functools.partial(_mobileone_kernel, ksize=ksize)

    out_flat = pl.pallas_call(
        kernel,
        out_shape=jax.ShapeDtypeStruct((N, H, WC), x_nchw.dtype),
        grid=(N // batch_block,),
        in_specs=[
            pl.BlockSpec((batch_block, Hp, WpCp), lambda n: (n, 0, 0)),
            # Grid-invariant blocks: single-buffer them (double-buffering a block
            # whose index_map never changes only doubles its VMEM footprint).
            pl.BlockSpec((ksize, WpCp, WC), lambda n: (0, 0, 0),
                         pipeline_mode=pl.Buffered(1)),
            pl.BlockSpec((1, WC), lambda n: (0, 0),
                         pipeline_mode=pl.Buffered(1)),
        ],
        out_specs=pl.BlockSpec((batch_block, H, WC), lambda n: (n, 0, 0)),
        compiler_params=pltpu.CompilerParams(
            dimension_semantics=("parallel",),
            vmem_limit_bytes=vmem_limit),
        cost_estimate=cost,
    )(x_flat, w_big, b_big)

    return jnp.transpose(out_flat.reshape(N, H, W, Cout), (0, 3, 1, 2))


# ------------------- reference (plain JAX, multi-branch, f32) -------------------
def _ref_forward(x, raw, *, padding=1, eps=1e-5):
    # NOTE: assumes cin == cout (identity branch present), matching the demo config.
    def bn(y, g, b, m, v):
        return ((y - m[None, :, None, None]) / jnp.sqrt(v + eps)[None, :, None, None]
                * g[None, :, None, None] + b[None, :, None, None])

    def conv(y, w, p):
        return lax.conv_general_dilated(
            y, w, window_strides=(1, 1), padding=((p, p), (p, p)),
            dimension_numbers=("NCHW", "OIHW", "NCHW"))

    identity_out = bn(x, *raw["bn_id"])
    scale_out = bn(conv(x, raw["w1_oihw"], 0), *raw["bn_1"])
    out = scale_out + identity_out
    for b in range(raw["w3_oihw"].shape[0]):
        out = out + bn(conv(x, raw["w3_oihw"][b], padding), *raw["bn_3"][b])
    return jnp.maximum(out, 0.0)


# ----------------------------- parameter construction -----------------------------
def _make_params(key, cin, cout, ksize, num_branches):
    keys = jax.random.split(key, 2 + num_branches + 2)
    it = iter(keys)

    def bn_params(k, c):
        k1, k2, k3, k4 = jax.random.split(k, 4)
        gamma = 1.0 + 0.1 * jax.random.normal(k1, (c,), jnp.float32)
        beta = 0.1 * jax.random.normal(k2, (c,), jnp.float32)
        mean = 0.1 * jax.random.normal(k3, (c,), jnp.float32)
        var = jax.random.uniform(k4, (c,), jnp.float32, 0.5, 1.5)
        return gamma, beta, mean, var

    w3_oihw = 0.1 * jax.random.normal(next(it),
                                      (num_branches, cout, cin, ksize, ksize),
                                      jnp.float32)
    w1_oihw = 0.1 * jax.random.normal(next(it), (cout, cin, 1, 1), jnp.float32)
    bn_3 = [bn_params(next(it), cout) for _ in range(num_branches)]
    bn_1 = bn_params(next(it), cout)
    bn_id = bn_params(next(it), cin)
    return {"w3_oihw": w3_oihw, "w1_oihw": w1_oihw,
            "bn_3": bn_3, "bn_1": bn_1, "bn_id": bn_id}


if __name__ == "__main__":
    N, C, H, W = 2, 8, 16, 16
    KSIZE, PAD, NUM_BRANCHES = 3, 1, 2

    key = jax.random.PRNGKey(0)
    kx, kp = jax.random.split(key)
    x = jax.random.normal(kx, (N, C, H, W), jnp.float32)

    raw = _make_params(kp, C, C, KSIZE, NUM_BRANCHES)
    w_eff, b_eff = _reparam_kernel_bias(raw, C, C, KSIZE)

    fwd = jax.jit(functools.partial(mobileone_block_forward, ksize=KSIZE, padding=PAD))
    y = jax.block_until_ready(fwd(x, w_eff, b_eff))

    y_ref = _ref_forward(x, raw, padding=PAD)
    # bf16 matmul operands (f32 accumulation) -> loosened tolerance vs the f32 ref.
    np.testing.assert_allclose(np.asarray(y), np.asarray(y_ref), rtol=5e-2, atol=5e-2)

    print("KERNEL_OK")
</pallas_src>

<mosaic_0001>
module attributes {stable_mosaic.version = 11 : i64} {
  func.func @_mobileone_kernel(%arg0: i32, %arg1: memref<2x18x256xbf16, #tpu.memory_space<vmem>>, %arg2: memref<3x256x128xbf16, #tpu.memory_space<vmem>>, %arg3: memref<1x128xf32, #tpu.memory_space<vmem>>, %arg4: memref<2x16x128xf32, #tpu.memory_space<vmem>>) attributes {dimension_semantics = [#tpu.dimension_semantics<parallel>], iteration_bounds = array<i64: 1>, scalar_prefetch = 0 : i64, scratch_operands = 0 : i64, tpu.core_type = #tpu.core_type<tc>, window_params = [{transform_indices = @transform_0, window_bounds = array<i64: 2, 18, 256>}, {pipeline_mode = #tpu.pipeline_mode<synchronous>, transform_indices = @transform_1, window_bounds = array<i64: 3, 256, 128>}, {pipeline_mode = #tpu.pipeline_mode<synchronous>, transform_indices = @transform_2, window_bounds = array<i64: 1, 128>}, {transform_indices = @transform_3, window_bounds = array<i64: 2, 16, 128>}]} {
    %c0 = arith.constant 0 : index
    %c0_0 = arith.constant 0 : index
    %c0_1 = arith.constant 0 : index
    %0 = vector.load %arg1[%c0, %c0_0, %c0_1] : memref<2x18x256xbf16, #tpu.memory_space<vmem>>, vector<2x16x256xbf16>
    %1 = vector.shape_cast %0 : vector<2x16x256xbf16> to vector<32x256xbf16>
    %c0_2 = arith.constant 0 : index
    %c0_3 = arith.constant 0 : index
    %c0_4 = arith.constant 0 : index
    %2 = vector.load %arg2[%c0_2, %c0_3, %c0_4] : memref<3x256x128xbf16, #tpu.memory_space<vmem>>, vector<1x256x128xbf16>
    %3 = vector.shape_cast %2 : vector<1x256x128xbf16> to vector<256x128xbf16>
    %cst = arith.constant dense<0.000000e+00> : vector<32x128xf32>
    %4 = tpu.matmul %1, %3, %cst {dimension_numbers = #tpu.dot_dimension_numbers<[1], [0], [0], [1], [0, 0, 1, 1], [], []>} : vector<32x256xbf16>, vector<256x128xbf16>, vector<32x128xf32> -> vector<32x128xf32>
    %c0_5 = arith.constant 0 : index
    %c1 = arith.constant 1 : index
    %c0_6 = arith.constant 0 : index
    %5 = vector.load %arg1[%c0_5, %c1, %c0_6] : memref<2x18x256xbf16, #tpu.memory_space<vmem>>, vector<2x16x256xbf16>
    %6 = vector.shape_cast %5 : vector<2x16x256xbf16> to vector<32x256xbf16>
    %c1_7 = arith.constant 1 : index
    %c0_8 = arith.constant 0 : index
    %c0_9 = arith.constant 0 : index
    %7 = vector.load %arg2[%c1_7, %c0_8, %c0_9] : memref<3x256x128xbf16, #tpu.memory_space<vmem>>, vector<1x256x128xbf16>
    %8 = vector.shape_cast %7 : vector<1x256x128xbf16> to vector<256x128xbf16>
    %cst_10 = arith.constant dense<0.000000e+00> : vector<32x128xf32>
    %9 = tpu.matmul %6, %8, %cst_10 {dimension_numbers = #tpu.dot_dimension_numbers<[1], [0], [0], [1], [0, 0, 1, 1], [], []>} : vector<32x256xbf16>, vector<256x128xbf16>, vector<32x128xf32> -> vector<32x128xf32>
    %10 = arith.addf %4, %9 : vector<32x128xf32>
    %c0_11 = arith.constant 0 : index
    %c2 = arith.constant 2 : index
    %c0_12 = arith.constant 0 : index
    %11 = vector.load %arg1[%c0_11, %c2, %c0_12] : memref<2x18x256xbf16, #tpu.memory_space<vmem>>, vector<2x16x256xbf16>
    %12 = vector.shape_cast %11 : vector<2x16x256xbf16> to vector<32x256xbf16>
    %c2_13 = arith.constant 2 : index
    %c0_14 = arith.constant 0 : index
    %c0_15 = arith.constant 0 : index
    %13 = vector.load %arg2[%c2_13, %c0_14, %c0_15] : memref<3x256x128xbf16, #tpu.memory_space<vmem>>, vector<1x256x128xbf16>
    %14 = vector.shape_cast %13 : vector<1x256x128xbf16> to vector<256x128xbf16>
    %cst_16 = arith.constant dense<0.000000e+00> : vector<32x128xf32>
    %15 = tpu.matmul %12, %14, %cst_16 {dimension_numbers = #tpu.dot_dimension_numbers<[1], [0], [0], [1], [0, 0, 1, 1], [], []>} : vector<32x256xbf16>, vector<256x128xbf16>, vector<32x128xf32> -> vector<32x128xf32>
    %16 = arith.addf %10, %15 : vector<32x128xf32>
    %c0_17 = arith.constant 0 : index
    %c0_18 = arith.constant 0 : index
    %17 = vector.load %arg3[%c0_17, %c0_18] : memref<1x128xf32, #tpu.memory_space<vmem>>, vector<1x128xf32>
    %18 = vector.broadcast %17 : vector<1x128xf32> to vector<32x128xf32>
    %19 = arith.addf %16, %18 : vector<32x128xf32>
    %cst_19 = arith.constant 0.000000e+00 : f32
    %20 = vector.broadcast %cst_19 : f32 to vector<32x128xf32>
    %21 = arith.maximumf %19, %20 : vector<32x128xf32>
    %22 = vector.shape_cast %21 : vector<32x128xf32> to vector<2x16x128xf32>
    %c0_20 = arith.constant 0 : index
    %c0_21 = arith.constant 0 : index
    %c0_22 = arith.constant 0 : index
    %23 = vector.load %arg4[%c0_20, %c0_21, %c0_22] : memref<2x16x128xf32, #tpu.memory_space<vmem>>, vector<2x16x128xf32>
    tpu.vector_store %arg4[%c0_20, %c0_21, %c0_22], %22 {strides = array<i32>} : memref<2x16x128xf32, #tpu.memory_space<vmem>>, vector<2x16x128xf32>,
    return
  }
  func.func @transform_0(%arg0: i32) -> (i32, i32, i32) {
    %c0_i32 = arith.constant 0 : i32
    %c0_i32_0 = arith.constant 0 : i32
    %c0_i32_1 = arith.constant 0 : i32
    return %arg0, %c0_i32, %c0_i32_0 : i32, i32, i32
  }
  func.func @transform_1(%arg0: i32) -> (i32, i32, i32) {
    %c0_i32 = arith.constant 0 : i32
    %c0_i32_0 = arith.constant 0 : i32
    %c0_i32_1 = arith.constant 0 : i32
    %c0_i32_2 = arith.constant 0 : i32
    return %c0_i32, %c0_i32_0, %c0_i32_1 : i32, i32, i32
  }
  func.func @transform_2(%arg0: i32) -> (i32, i32) {
    %c0_i32 = arith.constant 0 : i32
    %c0_i32_0 = arith.constant 0 : i32
    %c0_i32_1 = arith.constant 0 : i32
    return %c0_i32, %c0_i32_0 : i32, i32
  }
  func.func @transform_3(%arg0: i32) -> (i32, i32, i32) {
    %c0_i32 = arith.constant 0 : i32
    %c0_i32_0 = arith.constant 0 : i32
    %c0_i32_1 = arith.constant 0 : i32
    return %arg0, %c0_i32, %c0_i32_0 : i32, i32, i32
  }
}

</mosaic_0001>

<llo_original>
// kernel: tile.8
$region0: #{tile.8}
  #allocation0 [shape = 's32[1]{0}', space=sflag, size = 0x4, scoped, tag = 'scoped memory for tile.8']
  %s0 = inlined_call_operand.vmem [shape: f32[8], index: 0, kind: input, shape index: {}]
  %s1 = inlined_call_operand.vmem [shape: f32[16,8], index: 1, kind: output, shape index: {}]
  // Predicated region
  $region2: #{tile.8} parent=0 // pred_check
    _
  $region3: #{tile.8} parent=0 // pred_check_branch
    %3 = sbr.rel (0) target = $region5
  $region4: #{tile.8} parent=0 // pred_region
    _
  $region5: #{tile.8} parent=0 // pred_fallthru
    _
  %v4 = vld [vmem:[%s0] ss:$0 sm:$0xff]
  %5 = vst [vmem:[%s1] sm:$0xff] %v4
  %s6 = scalar_lea.vmem %s1, 8
  %7 = vst [vmem:[%s6] sm:$0xff] %v4

// kernel: tile.9
$region0: #{tile.9}
  %s0 = inlined_call_operand.vmem [shape: f32[16,8], index: 0, kind: input, shape index: {}]
  %s1 = inlined_call_operand.vmem [shape: f32[1,128], index: 1, kind: output, shape index: {}]
  $region1: #{tile.9} parent=0
    #allocation0 [shape = 'u8[4096]{0}', space=vmem, size = 0x1000, scoped, tag = 'scoped mem for output reshape']
    %v2 = vld [vmem:[%s0] sm:$0x1]
    %vm3 = vcmask 64512
    %4 = vst.msk [vmem:[#allocation0] sm:$0x1] %vm3, %v2
    %s5 = scalar_lea.vmem %s0, 15
    %v6 = vld [vmem:[%s5] sm:$0x1]
    %7 = vrot.lane.b32.xlu0 %v6, 120
    %v8 = vpop.permute.xlu0 %7
    %vm9 = vcmask 1048512
    %10 = vst.msk [vmem:[#allocation0] sm:$0x1] %vm9, %v8
    %s11 = scalar_lea.vmem %s0, 14
    %v12 = vld [vmem:[%s11] sm:$0x1]
    %13 = vrot.lane.b32.xlu0 %v12, 112
    %v14 = vpop.permute.xlu0 %13
    %vm15 = vcmask 982912
    %16 = vst.msk [vmem:[#allocation0] sm:$0x1] %vm15, %v14
    %s17 = scalar_lea.vmem %s0, 13
    %v18 = vld [vmem:[%s17] sm:$0x1]
    %19 = vrot.lane.b32.xlu0 %v18, 104
    %v20 = vpop.permute.xlu0 %19
    %vm21 = vcmask 917312
    %22 = vst.msk [vmem:[#allocation0] sm:$0x1] %vm21, %v20
    %s23 = scalar_lea.vmem %s0, 12
    %v24 = vld [vmem:[%s23] sm:$0x1]
    %25 = vrot.lane.b32.xlu0 %v24, 96
    %v26 = vpop.permute.xlu0 %25
    %vm27 = vcmask 851712
    %28 = vst.msk [vmem:[#allocation0] sm:$0x1] %vm27, %v26
    %s29 = scalar_lea.vmem %s0, 11
    %v30 = vld [vmem:[%s29] sm:$0x1]
    %31 = vrot.lane.b32.xlu0 %v30, 88
    %v32 = vpop.permute.xlu0 %31
    %vm33 = vcmask 786112
    %34 = vst.msk [vmem:[#allocation0] sm:$0x1] %vm33, %v32
    %s35 = scalar_lea.vmem %s0, 10
    %v36 = vld [vmem:[%s35] sm:$0x1]
    %37 = vrot.lane.b32.xlu0 %v36, 80
    %v38 = vpop.permute.xlu0 %37
    %vm39 = vcmask 720512
    %40 = vst.msk [vmem:[#allocation0] sm:$0x1] %vm39, %v38
    %s41 = scalar_lea.vmem %s0, 9
    %v42 = vld [vmem:[%s41] sm:$0x1]
    %43 = vrot.lane.b32.xlu0 %v42, 72
    %v44 = vpop.permute.xlu0 %43
    %vm45 = vcmask 654912
    %46 = vst.msk [vmem:[#allocation0] sm:$0x1] %vm45, %v44
    %s47 = scalar_lea.vmem %s0, 8
    %v48 = vld [vmem:[%s47] sm:$0x1]
    %49 = vrot.lane.b32.xlu0 %v48, 64
    %v50 = vpop.permute.xlu0 %49
    %vm51 = vcmask 589312
    %52 = vst.msk [vmem:[#allocation0] sm:$0x1] %vm51, %v50
    %s53 = scalar_lea.vmem %s0, 7
    %v54 = vld [vmem:[%s53] sm:$0x1]
    %55 = vrot.lane.b32.xlu0 %v54, 56
    %v56 = vpop.permute.xlu0 %55
    %vm57 = vcmask 523712
    %58 = vst.msk [vmem:[#allocation0] sm:$0x1] %vm57, %v56
    %s59 = scalar_lea.vmem %s0, 6
    %v60 = vld [vmem:[%s59] sm:$0x1]
    %61 = vrot.lane.b32.xlu0 %v60, 48
    %v62 = vpop.permute.xlu0 %61
    %vm63 = vcmask 458112
    %64 = vst.msk [vmem:[#allocation0] sm:$0x1] %vm63, %v62
    %s65 = scalar_lea.vmem %s0, 5
    %v66 = vld [vmem:[%s65] sm:$0x1]
    %67 = vrot.lane.b32.xlu0 %v66, 40
    %v68 = vpop.permute.xlu0 %67
    %vm69 = vcmask 392512
    %70 = vst.msk [vmem:[#allocation0] sm:$0x1] %vm69, %v68
    %s71 = scalar_lea.vmem %s0, 4
    %v72 = vld [vmem:[%s71] sm:$0x1]
    %73 = vrot.lane.b32.xlu0 %v72, 32
    %v74 = vpop.permute.xlu0 %73
    %vm75 = vcmask 326912
    %76 = vst.msk [vmem:[#allocation0] sm:$0x1] %vm75, %v74
    %s77 = scalar_lea.vmem %s0, 3
    %v78 = vld [vmem:[%s77] sm:$0x1]
    %79 = vrot.lane.b32.xlu0 %v78, 24
    %v80 = vpop.permute.xlu0 %79
    %vm81 = vcmask 261312
    %82 = vst.msk [vmem:[#allocation0] sm:$0x1] %vm81, %v80
    %s83 = scalar_lea.vmem %s0, 2
    %v84 = vld [vmem:[%s83] sm:$0x1]
    %85 = vrot.lane.b32.xlu0 %v84, 16
    %v86 = vpop.permute.xlu0 %85
    %vm87 = vcmask 195712
    %88 = vst.msk [vmem:[#allocation0] sm:$0x1] %vm87, %v86
    %s89 = scalar_lea.vmem %s0, 1
    %v90 = vld [vmem:[%s89] sm:$0x1]
    %91 = vrot.lane.b32.xlu0 %v90, 8
    %v92 = vpop.permute.xlu0 %91
    %vm93 = vcmask 130112
    %94 = vst.msk [vmem:[#allocation0] sm:$0x1] %vm93, %v92
    %s96 = sshllo.u32 0, 1
    %v98 = vld [vmem:[#allocation0] sm:%s96]
    %s99 = sshllo.u32 0, 1
    %100 = vst [vmem:[%s1] sm:%s99] %v98

// kernel: mobileone_block_forward.1
$region0: #{mobileone_block_forward.1}
  #allocation0 [shape = 'u32[]', space=smem, size = 0x4, offset = 0x4, fixed_abs, tag = 'smem constant byte address 0x4 - core index']
  #allocation1 [shape = 'u32[144,128]{1,0:T(1,128)}', space=vmem, size = 0x12000, scoped, tag = 'internal scratch']
  %s0 = inlined_call_operand.vmem [shape: bf16[2,18,256], index: 0, kind: input, shape index: {}]
  %s1 = inlined_call_operand.vmem [shape: bf16[3,256,128], index: 1, kind: input, shape index: {}]
  %s2 = inlined_call_operand.vmem [shape: f32[1,128], index: 2, kind: input, shape index: {}]
  %s3 = inlined_call_operand.vmem [shape: f32[2,16,128], index: 3, kind: output, shape index: {}]
  %s4 = sld [smem:[#allocation0]]
  $region22: #{mobileone_block_forward.1} parent=0
    _
  %s6 = ssub.s32 1, %s4
  %s7 = scalar_select 0, %s6, %s4
  // Predicated region
  $region2: #{mobileone_block_forward.1} parent=0 // pred_check
    _
  $region3: #{mobileone_block_forward.1} parent=0 // pred_check_branch
    %9 = sbr.rel (0) target = $region5
  $region4: #{mobileone_block_forward.1} parent=0 // pred_region
    _
  $region5: #{mobileone_block_forward.1} parent=0 // pred_fallthru
    _
  // Predicated region
  $region6: #{mobileone_block_forward.1} parent=0 // pred_check
    _
  $region7: #{mobileone_block_forward.1} parent=0 // pred_check_branch
    %11 = sbr.rel (0) target = $region9
  $region8: #{mobileone_block_forward.1} parent=0 // pred_region
    _
  $region9: #{mobileone_block_forward.1} parent=0 // pred_fallthru
    _
  // Predicated region
  $region10: #{mobileone_block_forward.1} parent=0 // pred_check
    _
  $region11: #{mobileone_block_forward.1} parent=0 // pred_check_branch
    %13 = sbr.rel (0) target = $region13
  $region12: #{mobileone_block_forward.1} parent=0 // pred_region
    _
  $region13: #{mobileone_block_forward.1} parent=0 // pred_fallthru
    _
  %v15 = vld [vmem:[%s0] sm:$0xff]
  %v16 = vld [vmem:[%s0 + $0x8] sm:$0xff]
  %v17 = vld [vmem:[%s0 + $0x18] sm:$0xff]
  %v18 = vld [vmem:[%s0 + $0x20] sm:$0xff]
  %v19 = vld [vmem:[%s1] sm:$0xf]
  %v20 = vld [vmem:[%s1 + $0x4] sm:$0xf]
  %v21 = vld [vmem:[%s1 + $0x8] sm:$0xf]
  %v22 = vld [vmem:[%s1 + $0xc] sm:$0xf]
  %v23 = vld [vmem:[%s1 + $0x10] sm:$0xf]
  %v24 = vld [vmem:[%s1 + $0x14] sm:$0xf]
  %v25 = vld [vmem:[%s1 + $0x18] sm:$0xf]
  %v26 = vld [vmem:[%s1 + $0x1c] sm:$0xf]
  %v27 = vld [vmem:[%s1 + $0x20] sm:$0xf]
  %v28 = vld [vmem:[%s1 + $0x24] sm:$0xf]
  %v29 = vld [vmem:[%s1 + $0x28] sm:$0xf]
  %v30 = vld [vmem:[%s1 + $0x2c] sm:$0xf]
  %v31 = vld [vmem:[%s1 + $0x30] sm:$0xf]
  %v32 = vld [vmem:[%s1 + $0x34] sm:$0xf]
  %v33 = vld [vmem:[%s1 + $0x38] sm:$0xf]
  %v34 = vld [vmem:[%s1 + $0x3c] sm:$0xf]
  %v35 = vld [vmem:[%s1 + $0x40] sm:$0xf]
  %v36 = vld [vmem:[%s1 + $0x44] sm:$0xf]
  %v37 = vld [vmem:[%s1 + $0x48] sm:$0xf]
  %v38 = vld [vmem:[%s1 + $0x4c] sm:$0xf]
  %v39 = vld [vmem:[%s1 + $0x50] sm:$0xf]
  %v40 = vld [vmem:[%s1 + $0x54] sm:$0xf]
  %v41 = vld [vmem:[%s1 + $0x58] sm:$0xf]
  %v42 = vld [vmem:[%s1 + $0x5c] sm:$0xf]
  %v43 = vld [vmem:[%s1 + $0x60] sm:$0xf]
  %v44 = vld [vmem:[%s1 + $0x64] sm:$0xf]
  %v45 = vld [vmem:[%s1 + $0x68] sm:$0xf]
  %v46 = vld [vmem:[%s1 + $0x6c] sm:$0xf]
  %v47 = vld [vmem:[%s1 + $0x70] sm:$0xf]
  %v48 = vld [vmem:[%s1 + $0x74] sm:$0xf]
  %v49 = vld [vmem:[%s1 + $0x78] sm:$0xf]
  %v50 = vld [vmem:[%s1 + $0x7c] sm:$0xf]
  %v51 = vld [vmem:[%s0 + $0x10] sm:$0x11]
  %v52 = vld [vmem:[%s0 + $0x28] sm:$0x11]
  %vm53 = vsmask.f32 3328
  %vm54 = vsmask.f32 7440
  %vm55 = vmor %vm53, %vm54
  %v57 = vshrl.u32 %v15, 16
  %v59 = vrot.slane %v57, 4
  %v60 = vshll.u32 %v15, 16
  %v62 = vrot.slane %v60, 5
  %v63 = vor.u32 %v59, %v62
  %v64 = vrot.slane %v63, 4
  %v66 = vshll.u32 %v16, 16
  %v68 = vrot.slane %v66, 5
  %v69 = vsel %vm55, %v64, %v68
  %v70 = vshrl.u32 %v16, 16
  %v72 = vrot.slane %v70, 4
  %v73 = vor.u32 %v72, %v68
  %v74 = vrot.slane %v73, 4
  %v76 = vshll.u32 %v51, 16
  %v78 = vrot.slane %v76, 5
  %v79 = vsel %vm55, %v74, %v78
  %v81 = vshrl.u32 %v17, 16
  %v83 = vrot.slane %v81, 4
  %v84 = vshll.u32 %v17, 16
  %v86 = vrot.slane %v84, 5
  %v87 = vor.u32 %v83, %v86
  %v88 = vrot.slane %v87, 4
  %v90 = vshll.u32 %v18, 16
  %v92 = vrot.slane %v90, 5
  %v93 = vsel %vm55, %v88, %v92
  %v94 = vshrl.u32 %v18, 16
  %v96 = vrot.slane %v94, 4
  %v97 = vor.u32 %v96, %v92
  %v98 = vrot.slane %v97, 4
  %v100 = vshll.u32 %v52, 16
  %v102 = vrot.slane %v100, 5
  %v103 = vsel %vm55, %v98, %v102
  %s104 = scalar_lea.vmem %s1, 128
  %v105 = vld [vmem:[%s104] sm:$0xf]
  %v106 = vld [vmem:[%s104 + $0x4] sm:$0xf]
  %v107 = vld [vmem:[%s104 + $0x8] sm:$0xf]
  %v108 = vld [vmem:[%s104 + $0xc] sm:$0xf]
  %v109 = vld [vmem:[%s104 + $0x10] sm:$0xf]
  %v110 = vld [vmem:[%s104 + $0x14] sm:$0xf]
  %v111 = vld [vmem:[%s104 + $0x18] sm:$0xf]
  %v112 = vld [vmem:[%s104 + $0x1c] sm:$0xf]
  %v113 = vld [vmem:[%s104 + $0x20] sm:$0xf]
  %v114 = vld [vmem:[%s104 + $0x24] sm:$0xf]
  %v115 = vld [vmem:[%s104 + $0x28] sm:$0xf]
  %v116 = vld [vmem:[%s104 + $0x2c] sm:$0xf]
  %v117 = vld [vmem:[%s104 + $0x30] sm:$0xf]
  %v118 = vld [vmem:[%s104 + $0x34] sm:$0xf]
  %v119 = vld [vmem:[%s104 + $0x38] sm:$0xf]
  %v120 = vld [vmem:[%s104 + $0x3c] sm:$0xf]
  %v121 = vld [vmem:[%s104 + $0x40] sm:$0xf]
  %v122 = vld [vmem:[%s104 + $0x44] sm:$0xf]
  %v123 = vld [vmem:[%s104 + $0x48] sm:$0xf]
  %v124 = vld [vmem:[%s104 + $0x4c] sm:$0xf]
  %v125 = vld [vmem:[%s104 + $0x50] sm:$0xf]
  %v126 = vld [vmem:[%s104 + $0x54] sm:$0xf]
  %v127 = vld [vmem:[%s104 + $0x58] sm:$0xf]
  %v128 = vld [vmem:[%s104 + $0x5c] sm:$0xf]
  %v129 = vld [vmem:[%s104 + $0x60] sm:$0xf]
  %v130 = vld [vmem:[%s104 + $0x64] sm:$0xf]
  %v131 = vld [vmem:[%s104 + $0x68] sm:$0xf]
  %v132 = vld [vmem:[%s104 + $0x6c] sm:$0xf]
  %v133 = vld [vmem:[%s104 + $0x70] sm:$0xf]
  %v134 = vld [vmem:[%s104 + $0x74] sm:$0xf]
  %v135 = vld [vmem:[%s104 + $0x78] sm:$0xf]
  %v136 = vld [vmem:[%s104 + $0x7c] sm:$0xf]
  %v137 = vunpack.c.l.b16 %v69
  %v138 = vunpack.c.h.b16 %v69
  %v139 = vunpack.c.l.b16 %v79
  %v140 = vunpack.c.h.b16 %v79
  %v141 = vunpack.c.l.b16 %v93
  %v142 = vunpack.c.h.b16 %v93
  %v143 = vunpack.c.l.b16 %v103
  %v144 = vunpack.c.h.b16 %v103
  %v145 = vpack.c.b16 %v139, %v137
  %v146 = vpack.c.b16 %v140, %v138
  %v147 = vpack.c.b16 %v143, %v141
  %v148 = vpack.c.b16 %v144, %v142
  %v185 = vunpack.c.l.b16 %v105
  %v186 = vunpack.c.l.b16 %v106
  %v187 = vunpack.c.l.b16 %v107
  %v188 = vunpack.c.l.b16 %v108
  %v189 = vunpack.c.l.b16 %v109
  %v190 = vunpack.c.l.b16 %v110
  %v191 = vunpack.c.l.b16 %v111
  %v192 = vunpack.c.l.b16 %v112
  %v193 = vunpack.c.l.b16 %v113
  %v194 = vunpack.c.l.b16 %v114
  %v195 = vunpack.c.l.b16 %v115
  %v196 = vunpack.c.l.b16 %v116
  %v197 = vunpack.c.l.b16 %v117
  %v198 = vunpack.c.l.b16 %v118
  %v199 = vunpack.c.l.b16 %v119
  %v200 = vunpack.c.l.b16 %v120
  %v201 = vunpack.c.l.b16 %v121
  %v202 = vunpack.c.l.b16 %v122
  %v203 = vunpack.c.l.b16 %v123
  %v204 = vunpack.c.l.b16 %v124
  %v205 = vunpack.c.l.b16 %v125
  %v206 = vunpack.c.l.b16 %v126
  %v207 = vunpack.c.l.b16 %v127
  %v208 = vunpack.c.l.b16 %v128
  %v209 = vunpack.c.l.b16 %v129
  %v210 = vunpack.c.l.b16 %v130
  %v211 = vunpack.c.l.b16 %v131
  %v212 = vunpack.c.l.b16 %v132
  %v213 = vunpack.c.l.b16 %v133
  %v214 = vunpack.c.l.b16 %v134
  %v215 = vunpack.c.l.b16 %v135
  %v216 = vunpack.c.l.b16 %v136
  %v217 = vpack.c.b16 %v186, %v185
  %v218 = vpack.c.b16 %v188, %v187
  %v219 = vpack.c.b16 %v190, %v189
  %v220 = vpack.c.b16 %v192, %v191
  %v221 = vpack.c.b16 %v194, %v193
  %v222 = vpack.c.b16 %v196, %v195
  %v223 = vpack.c.b16 %v198, %v197
  %v224 = vpack.c.b16 %v200, %v199
  %v225 = vpack.c.b16 %v202, %v201
  %v226 = vpack.c.b16 %v204, %v203
  %v227 = vpack.c.b16 %v206, %v205
  %v228 = vpack.c.b16 %v208, %v207
  %v229 = vpack.c.b16 %v210, %v209
  %v230 = vpack.c.b16 %v212, %v211
  %v231 = vpack.c.b16 %v214, %v213
  %v232 = vpack.c.b16 %v216, %v215
  %249 = vmatprep.subr.bf16.mxu0 0
  %250 = vmatpush1.bf16.msra.mxu0 %v217
  %251 = vmatprep.subr.bf16.mxu0 0
  %252 = vmatpush1.bf16.msra.mxu0 %v218
  %253 = vmatprep.subr.bf16.mxu0 0
  %254 = vmatpush1.bf16.msra.mxu0 %v219
  %255 = vmatprep.subr.bf16.mxu0 0
  %256 = vmatpush1.bf16.msra.mxu0 %v220
  %257 = vmatprep.subr.bf16.mxu0 0
  %258 = vmatpush1.bf16.msra.mxu0 %v221
  %259 = vmatprep.subr.bf16.mxu0 0
  %260 = vmatpush1.bf16.msra.mxu0 %v222
  %261 = vmatprep.subr.bf16.mxu0 0
  %262 = vmatpush1.bf16.msra.mxu0 %v223
  %263 = vmatprep.subr.bf16.mxu0 0
  %264 = vmatpush1.bf16.msra.mxu0 %v224
  %265 = vmatprep.subr.bf16.mxu0 0
  %266 = vmatpush1.bf16.msra.mxu0 %v225
  %267 = vmatprep.subr.bf16.mxu0 0
  %268 = vmatpush1.bf16.msra.mxu0 %v226
  %269 = vmatprep.subr.bf16.mxu0 0
  %270 = vmatpush1.bf16.msra.mxu0 %v227
  %271 = vmatprep.subr.bf16.mxu0 0
  %272 = vmatpush1.bf16.msra.mxu0 %v228
  %273 = vmatprep.subr.bf16.mxu0 0
  %274 = vmatpush1.bf16.msra.mxu0 %v229
  %275 = vmatprep.subr.bf16.mxu0 0
  %276 = vmatpush1.bf16.msra.mxu0 %v230
  %277 = vmatprep.subr.bf16.mxu0 0
  %278 = vmatpush1.bf16.msra.mxu0 %v231
  %279 = vmatprep.subr.bf16.mxu0 0
  %280 = vmatpush1.bf16.msra.mxu0 %v232
  %281 = vmatprep.mubr.bf16.mxu0 %v146
  %282 = vmatmul.mubr.bf16.gmra.mrb[0].mxu0 %v145
  %v283 = vpop.f32.mrb[0].mxu0
  %v284 = vadd.f32 0.0, %v283
  %v285 = vpop.f32.mrb[0].mxu0
  %v286 = vpop.f32.mrb[0].mxu0
  %v287 = vadd.f32 0.0, %v286
  %v288 = vpop.f32.mrb[0].mxu0
  %289 = vmatprep.mubr.bf16.mxu0 %v148
  %290 = vmatmul.mubr.bf16.gmra.mrb[0].mxu0 %v147
  %v291 = vpop.f32.mrb[0].mxu0
  %v292 = vadd.f32 0.0, %v291
  %v293 = vpop.f32.mrb[0].mxu0
  %v294 = vpop.f32.mrb[0].mxu0
  %v295 = vadd.f32 0.0, %v294
  %v296 = vpop.f32.mrb[0].mxu0
  %297 = vdwg.mxu0
  %v302 = vunpack.c.l.b16 %v15
  %v303 = vunpack.c.h.b16 %v15
  %v304 = vunpack.c.l.b16 %v16
  %v305 = vunpack.c.h.b16 %v16
  %v306 = vunpack.c.l.b16 %v17
  %v307 = vunpack.c.h.b16 %v17
  %v308 = vunpack.c.l.b16 %v18
  %v309 = vunpack.c.h.b16 %v18
  %v310 = vpack.c.b16 %v304, %v302
  %v311 = vpack.c.b16 %v305, %v303
  %v312 = vpack.c.b16 %v308, %v306
  %v313 = vpack.c.b16 %v309, %v307
  %v350 = vunpack.c.l.b16 %v19
  %v351 = vunpack.c.l.b16 %v20
  %v352 = vunpack.c.l.b16 %v21
  %v353 = vunpack.c.l.b16 %v22
  %v354 = vunpack.c.l.b16 %v23
  %v355 = vunpack.c.l.b16 %v24
  %v356 = vunpack.c.l.b16 %v25
  %v357 = vunpack.c.l.b16 %v26
  %v358 = vunpack.c.l.b16 %v27
  %v359 = vunpack.c.l.b16 %v28
  %v360 = vunpack.c.l.b16 %v29
  %v361 = vunpack.c.l.b16 %v30
  %v362 = vunpack.c.l.b16 %v31
  %v363 = vunpack.c.l.b16 %v32
  %v364 = vunpack.c.l.b16 %v33
  %v365 = vunpack.c.l.b16 %v34
  %v366 = vunpack.c.l.b16 %v35
  %v367 = vunpack.c.l.b16 %v36
  %v368 = vunpack.c.l.b16 %v37
  %v369 = vunpack.c.l.b16 %v38
  %v370 = vunpack.c.l.b16 %v39
  %v371 = vunpack.c.l.b16 %v40
  %v372 = vunpack.c.l.b16 %v41
  %v373 = vunpack.c.l.b16 %v42
  %v374 = vunpack.c.l.b16 %v43
  %v375 = vunpack.c.l.b16 %v44
  %v376 = vunpack.c.l.b16 %v45
  %v377 = vunpack.c.l.b16 %v46
  %v378 = vunpack.c.l.b16 %v47
  %v379 = vunpack.c.l.b16 %v48
  %v380 = vunpack.c.l.b16 %v49
  %v381 = vunpack.c.l.b16 %v50
  %v382 = vpack.c.b16 %v351, %v350
  %v383 = vpack.c.b16 %v353, %v352
  %v384 = vpack.c.b16 %v355, %v354
  %v385 = vpack.c.b16 %v357, %v356
  %v386 = vpack.c.b16 %v359, %v358
  %v387 = vpack.c.b16 %v361, %v360
  %v388 = vpack.c.b16 %v363, %v362
  %v389 = vpack.c.b16 %v365, %v364
  %v390 = vpack.c.b16 %v367, %v366
  %v391 = vpack.c.b16 %v369, %v368
  %v392 = vpack.c.b16 %v371, %v370
  %v393 = vpack.c.b16 %v373, %v372
  %v394 = vpack.c.b16 %v375, %v374
  %v395 = vpack.c.b16 %v377, %v376
  %v396 = vpack.c.b16 %v379, %v378
  %v397 = vpack.c.b16 %v381, %v380
  %414 = vmatprep.subr.bf16.mxu0 0
  %415 = vmatpush1.bf16.msra.mxu0 %v382
  %416 = vmatprep.subr.bf16.mxu0 0
  %417 = vmatpush1.bf16.msra.mxu0 %v383
  %418 = vmatprep.subr.bf16.mxu0 0
  %419 = vmatpush1.bf16.msra.mxu0 %v384
  %420 = vmatprep.subr.bf16.mxu0 0
  %421 = vmatpush1.bf16.msra.mxu0 %v385
  %422 = vmatprep.subr.bf16.mxu0 0
  %423 = vmatpush1.bf16.msra.mxu0 %v386
  %424 = vmatprep.subr.bf16.mxu0 0
  %425 = vmatpush1.bf16.msra.mxu0 %v387
  %426 = vmatprep.subr.bf16.mxu0 0
  %427 = vmatpush1.bf16.msra.mxu0 %v388
  %428 = vmatprep.subr.bf16.mxu0 0
  %429 = vmatpush1.bf16.msra.mxu0 %v389
  %430 = vmatprep.subr.bf16.mxu0 0
  %431 = vmatpush1.bf16.msra.mxu0 %v390
  %432 = vmatprep.subr.bf16.mxu0 0
  %433 = vmatpush1.bf16.msra.mxu0 %v391
  %434 = vmatprep.subr.bf16.mxu0 0
  %435 = vmatpush1.bf16.msra.mxu0 %v392
  %436 = vmatprep.subr.bf16.mxu0 0
  %437 = vmatpush1.bf16.msra.mxu0 %v393
  %438 = vmatprep.subr.bf16.mxu0 0
  %439 = vmatpush1.bf16.msra.mxu0 %v394
  %440 = vmatprep.subr.bf16.mxu0 0
  %441 = vmatpush1.bf16.msra.mxu0 %v395
  %442 = vmatprep.subr.bf16.mxu0 0
  %443 = vmatpush1.bf16.msra.mxu0 %v396
  %444 = vmatprep.subr.bf16.mxu0 0
  %445 = vmatpush1.bf16.msra.mxu0 %v397
  %446 = vmatprep.mubr.bf16.mxu0 %v311
  %447 = vmatmul.mubr.bf16.gmra.mrb[0].mxu0 %v310
  %v448 = vpop.f32.mrb[0].mxu0
  %v449 = vadd.f32 %v284, %v448
  %v450 = vpop.f32.mrb[0].mxu0
  %v451 = vpop.f32.mrb[0].mxu0
  %v452 = vadd.f32 %v287, %v451
  %v453 = vpop.f32.mrb[0].mxu0
  %454 = vmatprep.mubr.bf16.mxu0 %v313
  %455 = vmatmul.mubr.bf16.gmra.mrb[0].mxu0 %v312
  %v456 = vpop.f32.mrb[0].mxu0
  %v457 = vadd.f32 %v292, %v456
  %v458 = vpop.f32.mrb[0].mxu0
  %v459 = vpop.f32.mrb[0].mxu0
  %v460 = vadd.f32 %v295, %v459
  %v461 = vpop.f32.mrb[0].mxu0
  %462 = vdwg.mxu0
  %v463 = vld [vmem:[%s0] sm:$0xee]
  %v464 = vld [vmem:[%s0 + $0x18] sm:$0xee]
  %vm469 = vcmask 1042432
  %vm470 = vcmask 1046532
  %vm471 = vmor %vm469, %vm470
  %v472 = vrot.slane %v463, 5
  %v473 = vrot.slane %v472, 4
  %v474 = vrot.slane %v16, 5
  %v475 = vsel %vm471, %v473, %v474
  %v476 = vrot.slane %v474, 4
  %v477 = vrot.slane %v51, 5
  %v478 = vsel %vm471, %v476, %v477
  %v479 = vrot.slane %v464, 5
  %v480 = vrot.slane %v479, 4
  %v481 = vrot.slane %v18, 5
  %v482 = vsel %vm471, %v480, %v481
  %v483 = vrot.slane %v481, 4
  %v484 = vrot.slane %v52, 5
  %v485 = vsel %vm471, %v483, %v484
  %s486 = scalar_lea.vmem %s1, 256
  %v487 = vld [vmem:[%s486] sm:$0xf]
  %v488 = vld [vmem:[%s486 + $0x4] sm:$0xf]
  %v489 = vld [vmem:[%s486 + $0x8] sm:$0xf]
  %v490 = vld [vmem:[%s486 + $0xc] sm:$0xf]
  %v491 = vld [vmem:[%s486 + $0x10] sm:$0xf]
  %v492 = vld [vmem:[%s486 + $0x14] sm:$0xf]
  %v493 = vld [vmem:[%s486 + $0x18] sm:$0xf]
  %v494 = vld [vmem:[%s486 + $0x1c] sm:$0xf]
  %v495 = vld [vmem:[%s486 + $0x20] sm:$0xf]
  %v496 = vld [vmem:[%s486 + $0x24] sm:$0xf]
  %v497 = vld [vmem:[%s486 + $0x28] sm:$0xf]
  %v498 = vld [vmem:[%s486 + $0x2c] sm:$0xf]
  %v499 = vld [vmem:[%s486 + $0x30] sm:$0xf]
  %v500 = vld [vmem:[%s486 + $0x34] sm:$0xf]
  %v501 = vld [vmem:[%s486 + $0x38] sm:$0xf]
  %v502 = vld [vmem:[%s486 + $0x3c] sm:$0xf]
  %v503 = vld [vmem:[%s486 + $0x40] sm:$0xf]
  %v504 = vld [vmem:[%s486 + $0x44] sm:$0xf]
  %v505 = vld [vmem:[%s486 + $0x48] sm:$0xf]
  %v506 = vld [vmem:[%s486 + $0x4c] sm:$0xf]
  %v507 = vld [vmem:[%s486 + $0x50] sm:$0xf]
  %v508 = vld [vmem:[%s486 + $0x54] sm:$0xf]
  %v509 = vld [vmem:[%s486 + $0x58] sm:$0xf]
  %v510 = vld [vmem:[%s486 + $0x5c] sm:$0xf]
  %v511 = vld [vmem:[%s486 + $0x60] sm:$0xf]
  %v512 = vld [vmem:[%s486 + $0x64] sm:$0xf]
  %v513 = vld [vmem:[%s486 + $0x68] sm:$0xf]
  %v514 = vld [vmem:[%s486 + $0x6c] sm:$0xf]
  %v515 = vld [vmem:[%s486 + $0x70] sm:$0xf]
  %v516 = vld [vmem:[%s486 + $0x74] sm:$0xf]
  %v517 = vld [vmem:[%s486 + $0x78] sm:$0xf]
  %v518 = vld [vmem:[%s486 + $0x7c] sm:$0xf]
  %v519 = vunpack.c.l.b16 %v475
  %v520 = vunpack.c.h.b16 %v475
  %v521 = vunpack.c.l.b16 %v478
  %v522 = vunpack.c.h.b16 %v478
  %v523 = vunpack.c.l.b16 %v482
  %v524 = vunpack.c.h.b16 %v482
  %v525 = vunpack.c.l.b16 %v485
  %v526 = vunpack.c.h.b16 %v485
  %v527 = vpack.c.b16 %v521, %v519
  %v528 = vpack.c.b16 %v522, %v520
  %v529 = vpack.c.b16 %v525, %v523
  %v530 = vpack.c.b16 %v526, %v524
  %v567 = vunpack.c.l.b16 %v487
  %v568 = vunpack.c.l.b16 %v488
  %v569 = vunpack.c.l.b16 %v489
  %v570 = vunpack.c.l.b16 %v490
  %v571 = vunpack.c.l.b16 %v491
  %v572 = vunpack.c.l.b16 %v492
  %v573 = vunpack.c.l.b16 %v493
  %v574 = vunpack.c.l.b16 %v494
  %v575 = vunpack.c.l.b16 %v495
  %v576 = vunpack.c.l.b16 %v496
  %v577 = vunpack.c.l.b16 %v497
  %v578 = vunpack.c.l.b16 %v498
  %v579 = vunpack.c.l.b16 %v499
  %v580 = vunpack.c.l.b16 %v500
  %v581 = vunpack.c.l.b16 %v501
  %v582 = vunpack.c.l.b16 %v502
  %v583 = vunpack.c.l.b16 %v503
  %v584 = vunpack.c.l.b16 %v504
  %v585 = vunpack.c.l.b16 %v505
  %v586 = vunpack.c.l.b16 %v506
  %v587 = vunpack.c.l.b16 %v507
  %v588 = vunpack.c.l.b16 %v508
  %v589 = vunpack.c.l.b16 %v509
  %v590 = vunpack.c.l.b16 %v510
  %v591 = vunpack.c.l.b16 %v511
  %v592 = vunpack.c.l.b16 %v512
  %v593 = vunpack.c.l.b16 %v513
  %v594 = vunpack.c.l.b16 %v514
  %v595 = vunpack.c.l.b16 %v515
  %v596 = vunpack.c.l.b16 %v516
  %v597 = vunpack.c.l.b16 %v517
  %v598 = vunpack.c.l.b16 %v518
  %v599 = vpack.c.b16 %v568, %v567
  %v600 = vpack.c.b16 %v570, %v569
  %v601 = vpack.c.b16 %v572, %v571
  %v602 = vpack.c.b16 %v574, %v573
  %v603 = vpack.c.b16 %v576, %v575
  %v604 = vpack.c.b16 %v578, %v577
  %v605 = vpack.c.b16 %v580, %v579
  %v606 = vpack.c.b16 %v582, %v581
  %v607 = vpack.c.b16 %v584, %v583
  %v608 = vpack.c.b16 %v586, %v585
  %v609 = vpack.c.b16 %v588, %v587
  %v610 = vpack.c.b16 %v590, %v589
  %v611 = vpack.c.b16 %v592, %v591
  %v612 = vpack.c.b16 %v594, %v593
  %v613 = vpack.c.b16 %v596, %v595
  %v614 = vpack.c.b16 %v598, %v597
  %631 = vmatprep.subr.bf16.mxu0 0
  %632 = vmatpush1.bf16.msra.mxu0 %v599
  %633 = vmatprep.subr.bf16.mxu0 0
  %634 = vmatpush1.bf16.msra.mxu0 %v600
  %635 = vmatprep.subr.bf16.mxu0 0
  %636 = vmatpush1.bf16.msra.mxu0 %v601
  %637 = vmatprep.subr.bf16.mxu0 0
  %638 = vmatpush1.bf16.msra.mxu0 %v602
  %639 = vmatprep.subr.bf16.mxu0 0
  %640 = vmatpush1.bf16.msra.mxu0 %v603
  %641 = vmatprep.subr.bf16.mxu0 0
  %642 = vmatpush1.bf16.msra.mxu0 %v604
  %643 = vmatprep.subr.bf16.mxu0 0
  %644 = vmatpush1.bf16.msra.mxu0 %v605
  %645 = vmatprep.subr.bf16.mxu0 0
  %646 = vmatpush1.bf16.msra.mxu0 %v606
  %647 = vmatprep.subr.bf16.mxu0 0
  %648 = vmatpush1.bf16.msra.mxu0 %v607
  %649 = vmatprep.subr.bf16.mxu0 0
  %650 = vmatpush1.bf16.msra.mxu0 %v608
  %651 = vmatprep.subr.bf16.mxu0 0
  %652 = vmatpush1.bf16.msra.mxu0 %v609
  %653 = vmatprep.subr.bf16.mxu0 0
  %654 = vmatpush1.bf16.msra.mxu0 %v610
  %655 = vmatprep.subr.bf16.mxu0 0
  %656 = vmatpush1.bf16.msra.mxu0 %v611
  %657 = vmatprep.subr.bf16.mxu0 0
  %658 = vmatpush1.bf16.msra.mxu0 %v612
  %659 = vmatprep.subr.bf16.mxu0 0
  %660 = vmatpush1.bf16.msra.mxu0 %v613
  %661 = vmatprep.subr.bf16.mxu0 0
  %662 = vmatpush1.bf16.msra.mxu0 %v614
  %663 = vmatprep.mubr.bf16.mxu0 %v528
  %664 = vmatmul.mubr.bf16.gmra.mrb[0].mxu0 %v527
  %v665 = vpop.f32.mrb[0].mxu0
  %v666 = vadd.f32 0.0, %v665
  %v667 = vpop.f32.mrb[0].mxu0
  %v668 = vpop.f32.mrb[0].mxu0
  %v669 = vadd.f32 0.0, %v668
  %v670 = vpop.f32.mrb[0].mxu0
  %671 = vmatprep.mubr.bf16.mxu0 %v530
  %672 = vmatmul.mubr.bf16.gmra.mrb[0].mxu0 %v529
  %v673 = vpop.f32.mrb[0].mxu0
  %v674 = vadd.f32 0.0, %v673
  %v675 = vpop.f32.mrb[0].mxu0
  %v676 = vpop.f32.mrb[0].mxu0
  %v677 = vadd.f32 0.0, %v676
  %v678 = vpop.f32.mrb[0].mxu0
  %679 = vdwg.mxu0
  %v680 = vadd.f32 %v449, %v666
  %v681 = vadd.f32 %v452, %v669
  %v682 = vadd.f32 %v457, %v674
  %v683 = vadd.f32 %v460, %v677
  %v684 = vld [vmem:[%s2] sm:$0x1]
  %v686 = vlaneseq
  %v687 = vshrl.u32 %v686, 7
  %v688 = vsub.s32 0, %v687
  %v689 = vrot.slane %v684, %v688
  %v691 = vadd.f32 %v680, %v689
  %v692 = vadd.f32 %v681, %v689
  %v693 = vadd.f32 %v682, %v689
  %v694 = vadd.f32 %v683, %v689
  %v695 = vmax.f32 %v691, 0.0
  %v696 = vmax.f32 %v692, 0.0
  %v697 = vmax.f32 %v693, 0.0
  %v698 = vmax.f32 %v694, 0.0
  %699 = vst [vmem:[%s3] sm:$0xff] %v695
  %700 = vst [vmem:[%s3 + $0x8] sm:$0xff] %v696
  %701 = vst [vmem:[%s3 + $0x10] sm:$0xff] %v697
  %702 = vst [vmem:[%s3 + $0x18] sm:$0xff] %v698
  // Predicated region
  $region14: #{mobileone_block_forward.1} parent=0 // pred_check
    _
  $region15: #{mobileone_block_forward.1} parent=0 // pred_check_branch
    %704 = sbr.rel (0) target = $region17
  $region16: #{mobileone_block_forward.1} parent=0 // pred_region
    _
  $region17: #{mobileone_block_forward.1} parent=0 // pred_fallthru
    _
  // Predicated region
  $region18: #{mobileone_block_forward.1} parent=0 // pred_check
    _
  $region19: #{mobileone_block_forward.1} parent=0 // pred_check_branch
    %706 = sbr.rel (0) target = $region21
  $region20: #{mobileone_block_forward.1} parent=0 // pred_region
    _
  $region21: #{mobileone_block_forward.1} parent=0 // pred_fallthru
    _

</llo_original>
